<compile_context>
chip_gen: v5e
topology: v5e:2x2
jax: 0.10.0
libtpu: 0.0.40
codegen_flags: <defaults>
</compile_context>

<pallas_src>
import functools

import jax
import jax.numpy as jnp
from jax import lax
from jax.experimental import pallas as pl
from jax.experimental.pallas import tpu as pltpu

_LANE = 128


# ------------------------------- kernels ------------------------------------


def _pnorm_kernel(x_ref, o_ref, *, eps, inv_cm1):
    # Block is (n_tile, C, s_tile, 128) [4-D path] or (n_tile, C, L) [3-D].
    # The channel axis is always axis=1.
    x = x_ref[...].astype(jnp.float32)
    mean = jnp.mean(x, axis=1, keepdims=True)
    d = x - mean
    sumsq = jnp.sum(d * d, axis=1, keepdims=True)
    # unbiased variance folded straight into the rsqrt argument (EUP).
    inv_std = lax.rsqrt(sumsq * jnp.float32(inv_cm1) + jnp.float32(eps))
    shift = -mean * inv_std
    # Re-read x from VMEM (cheap vld) rather than keeping `d` live: the
    # per-element epilogue is one mul + one add.
    o_ref[...] = (x_ref[...].astype(jnp.float32) * inv_std + shift).astype(o_ref.dtype)


def _pnorm_affine_kernel(x_ref, g_ref, b_ref, o_ref, *, eps, inv_cm1):
    x = x_ref[...].astype(jnp.float32)
    mean = jnp.mean(x, axis=1, keepdims=True)
    d = x - mean
    sumsq = jnp.sum(d * d, axis=1, keepdims=True)
    inv_std = lax.rsqrt(sumsq * jnp.float32(inv_cm1) + jnp.float32(eps))
    # Per-position scale/shift (broadcast over the leading batch/channel axes);
    # per-element work in the epilogue is a single fused mul-add.
    scale = inv_std * g_ref[...]
    shift = b_ref[...] - mean * scale
    o_ref[...] = (x_ref[...].astype(jnp.float32) * scale + shift).astype(o_ref.dtype)


# ------------------------------ tiling logic ---------------------------------


def _vmem_budgets():
    """(double-buffer working-set budget, vmem_limit cap), generation-aware."""
    cap = None
    try:
        cap = int(getattr(pltpu.get_tpu_info(), "vmem_capacity_bytes", 0)) or None
    except Exception:
        cap = None
    if cap is None or cap <= (64 << 20):
        # v7x-class (64 MiB VMEM per TC) or unknown: conservative.
        return 14 << 20, 44 << 20
    # v5e / v6e: 128 MiB physical VMEM; only the scoped default is small.
    return 18 << 20, 72 << 20


def _choose_tiling(n, c, hw, itemsize, affine, dbuf_budget):
    """Pick (use_4d, p_tile, n_tile, bufs): positions & batch elems per step."""
    sub = max(8, 32 // itemsize)          # dtype-native sublane multiple

    def io_bytes(n_t, p_t, bufs):
        b = bufs * 2 * n_t * c * p_t * itemsize          # x block + out block
        if affine:
            b += 2 * 2 * p_t * 4                         # gamma + beta (f32)
        return b

    # 4-D layout needs HW % 128 == 0 and a C small enough that a native tile
    # (sub x 128 positions) still fits the pipeline budget.
    use_4d = (hw % _LANE == 0) and io_bytes(1, min(sub * _LANE, hw), 2) <= dbuf_budget
    unit = (sub * _LANE) if use_4d else _LANE            # smallest legal granule

    # --- spatial tile --------------------------------------------------------
    if io_bytes(1, hw, 2) <= dbuf_budget:
        p_tile = hw                                      # whole spatial extent
    elif hw <= unit:
        p_tile = hw                                      # full dim (always legal)
    else:
        per_pos = 2 * 2 * c * itemsize + (16 if affine else 0)
        k = max(1, min(hw // unit, (dbuf_budget // per_pos) // unit))
        p_tile = k * unit

    # --- batch tile (only when the whole spatial extent fits per step) -------
    n_tile = 1
    if p_tile == hw and n > 1:
        per_batch = 2 * 2 * c * hw * itemsize            # dbuf in+out per elem
        fit = max(1, (dbuf_budget - (16 * hw if affine else 0)) // max(per_batch, 1))
        want = max(1, (4 << 20) // max(c * hw * itemsize, 1))   # ~4 MiB x block
        n_tile = int(min(n, fit, want))

    # --- buffering depth ------------------------------------------------------
    bufs = 2
    if io_bytes(n_tile, p_tile, 2) > dbuf_budget:
        # TODO(synk): for extremely large C a two-pass scheme (sum/sumsq over a
        # C grid axis) would keep double-buffering; fall back to single buffer.
        bufs = 1
    elif (p_tile == unit and p_tile < hw and n_tile == 1
          and hw // p_tile >= 4
          and io_bytes(1, p_tile, 3) <= dbuf_budget):
        bufs = 3                                         # hide DMA issue latency

    return use_4d, p_tile, n_tile, bufs


def _spec(block_shape, index_map, bufs):
    if bufs == 2:
        return pl.BlockSpec(block_shape, index_map)
    return pl.BlockSpec(block_shape, index_map, pipeline_mode=pl.Buffered(bufs))


# ------------------------------- wrapper -------------------------------------


def positional_norm_2d(x, gamma=None, beta=None, *, eps=1e-5):
    """x: (N, C, H, W).  gamma/beta: (1, 1, H, W) or None (affine=False)."""
    n, c, h, w = x.shape
    hw = h * w
    affine = (gamma is not None) or (beta is not None)
    itemsize = jnp.dtype(x.dtype).itemsize

    dbuf_budget, vmem_cap = _vmem_budgets()
    use_4d, p_tile, n_tile, bufs = _choose_tiling(
        n, c, hw, itemsize, affine, dbuf_budget)

    grid = (pl.cdiv(hw, p_tile), pl.cdiv(n, n_tile))     # (spatial, batch)

    if use_4d:
        s_total, s_tile = hw // _LANE, p_tile // _LANE
        x_in = x.reshape(n, c, s_total, _LANE)           # free reshape (contig)
        x_blk = (n_tile, c, s_tile, _LANE)
        x_map = lambda s, b: (b, 0, s, 0)
        out_shape = jax.ShapeDtypeStruct((n, c, s_total, _LANE), x.dtype)
    else:
        x_in = x.reshape(n, c, hw)                       # free reshape (contig)
        x_blk = (n_tile, c, p_tile)
        x_map = lambda s, b: (b, 0, s)
        out_shape = jax.ShapeDtypeStruct((n, c, hw), x.dtype)

    out_bufs = 1 if bufs == 1 else 2
    x_spec = _spec(x_blk, x_map, bufs)
    out_spec = _spec(x_blk, x_map, out_bufs)

    # Explicit VMEM limit: pipeline buffers + headroom for in-kernel f32
    # temporaries and compiler scratch, capped per chip generation.
    x_blk_bytes = n_tile * c * p_tile * itemsize
    io = bufs * x_blk_bytes + out_bufs * x_blk_bytes
    if affine:
        io += 2 * 2 * p_tile * 4
    f32_blk = n_tile * c * p_tile * 4
    vmem_limit = int(min(vmem_cap, max(8 << 20, io + 3 * f32_blk + (2 << 20))))

    # TODO(synk): on v7x consider pltpu.CORE_PARALLEL on the leading (spatial)
    # axis / an explicit core_map split if plain "parallel" does not engage
    # the 2-TC megacore split.
    compiler_params = pltpu.CompilerParams(
        dimension_semantics=("parallel", "parallel"),
        vmem_limit_bytes=vmem_limit,
    )

    # C == 1 -> 1/(C-1) is NaN, matching torch's unbiased variance of a single
    # element (NaN), intentionally.
    inv_cm1 = (1.0 / (c - 1)) if c > 1 else float("nan")

    if affine:
        if gamma is None:
            gamma = jnp.ones((1, 1, h, w), jnp.float32)
        if beta is None:
            beta = jnp.zeros((1, 1, h, w), jnp.float32)
        g = gamma.astype(jnp.float32)
        bt = beta.astype(jnp.float32)
        if use_4d:
            g = g.reshape(1, s_total, _LANE)
            bt = bt.reshape(1, s_total, _LANE)
            gb_blk = (1, s_tile, _LANE)
            gb_map = lambda s, b: (0, s, 0)              # constant along batch axis
        else:
            g = g.reshape(1, hw)
            bt = bt.reshape(1, hw)
            gb_blk = (1, p_tile)
            gb_map = lambda s, b: (0, s)                 # constant along batch axis
        gb_spec = pl.BlockSpec(gb_blk, gb_map)

        out = pl.pallas_call(
            functools.partial(_pnorm_affine_kernel, eps=eps, inv_cm1=inv_cm1),
            out_shape=out_shape,
            grid_spec=pltpu.PrefetchScalarGridSpec(
                num_scalar_prefetch=0,
                grid=grid,
                in_specs=[x_spec, gb_spec, gb_spec],
                out_specs=out_spec,
            ),
            compiler_params=compiler_params,
        )(x_in, g, bt)
    else:
        out = pl.pallas_call(
            functools.partial(_pnorm_kernel, eps=eps, inv_cm1=inv_cm1),
            out_shape=out_shape,
            grid_spec=pltpu.PrefetchScalarGridSpec(
                num_scalar_prefetch=0,
                grid=grid,
                in_specs=[x_spec],
                out_specs=out_spec,
            ),
            compiler_params=compiler_params,
        )(x_in)

    return out.reshape(n, c, h, w)


# ------------------------------- reference -----------------------------------


def positional_norm_2d_ref(x, gamma=None, beta=None, *, eps=1e-5):
    """Pure-JAX reference matching the PyTorch forward exactly."""
    xf = x.astype(jnp.float32)
    mean = jnp.mean(xf, axis=1, keepdims=True)
    var = jnp.var(xf, axis=1, keepdims=True, ddof=1)     # unbiased, like torch
    y = (xf - mean) / jnp.sqrt(var + eps)
    if gamma is not None:
        y = y * gamma.astype(jnp.float32)
    if beta is not None:
        y = y + beta.astype(jnp.float32)
    return y.astype(x.dtype)


if __name__ == "__main__":
    key = jax.random.PRNGKey(0)
    k1, k2 = jax.random.split(key)

    N, C, H, W = 2, 4, 16, 16
    x = jax.random.normal(k1, (N, C, H, W), dtype=jnp.float32)

    # affine=True path (beta = zeros, gamma = ones, as in __init__)
    gamma = jnp.ones((1, 1, H, W), jnp.float32)
    beta = jnp.zeros((1, 1, H, W), jnp.float32)
    out = jax.block_until_ready(positional_norm_2d(x, gamma, beta, eps=1e-5))
    ref = positional_norm_2d_ref(x, gamma, beta, eps=1e-5)
    assert out.shape == (N, C, H, W)
    assert jnp.allclose(out, ref, atol=1e-5, rtol=1e-5), "affine mismatch"

    # affine=False path (module default): kernel variant with no gamma/beta.
    out2 = jax.block_until_ready(positional_norm_2d(x, eps=1e-5))
    ref2 = positional_norm_2d_ref(x, eps=1e-5)
    assert jnp.allclose(out2, ref2, atol=1e-5, rtol=1e-5), "no-affine mismatch"

    # H*W not a multiple of 128: exercises the pad-free ragged 3-D layout.
    x3 = jax.random.normal(k2, (2, 4, 10, 10), dtype=jnp.float32)
    out3 = jax.block_until_ready(positional_norm_2d(x3, eps=1e-5))
    ref3 = positional_norm_2d_ref(x3, eps=1e-5)
    assert out3.shape == x3.shape
    assert jnp.allclose(out3, ref3, atol=1e-5, rtol=1e-5), "ragged mismatch"

    # Ragged + affine.
    g3 = jax.random.normal(k1, (1, 1, 10, 10), jnp.float32)
    b3 = jax.random.normal(k2, (1, 1, 10, 10), jnp.float32)
    out4 = jax.block_until_ready(positional_norm_2d(x3, g3, b3, eps=1e-5))
    ref4 = positional_norm_2d_ref(x3, g3, b3, eps=1e-5)
    assert jnp.allclose(out4, ref4, atol=1e-5, rtol=1e-5), "ragged affine mismatch"

    print("KERNEL_OK")
</pallas_src>

<mosaic_0001>
module attributes {stable_mosaic.version = 11 : i64} {
  func.func @_pnorm_affine_kernel(%arg0: i32, %arg1: i32, %arg2: memref<2x4x2x128xf32, #tpu.memory_space<vmem>>, %arg3: memref<1x2x128xf32, #tpu.memory_space<vmem>>, %arg4: memref<1x2x128xf32, #tpu.memory_space<vmem>>, %arg5: memref<2x4x2x128xf32, #tpu.memory_space<vmem>>) attributes {dimension_semantics = [#tpu.dimension_semantics<parallel>, #tpu.dimension_semantics<parallel>], iteration_bounds = array<i64: 1, 1>, scalar_prefetch = 0 : i64, scratch_operands = 0 : i64, tpu.core_type = #tpu.core_type<tc>, window_params = [{transform_indices = @transform_0, window_bounds = array<i64: 2, 4, 2, 128>}, {transform_indices = @transform_1, window_bounds = array<i64: 1, 2, 128>}, {transform_indices = @transform_2, window_bounds = array<i64: 1, 2, 128>}, {transform_indices = @transform_3, window_bounds = array<i64: 2, 4, 2, 128>}]} {
    %c0 = arith.constant 0 : index
    %c0_0 = arith.constant 0 : index
    %c0_1 = arith.constant 0 : index
    %c0_2 = arith.constant 0 : index
    %0 = vector.load %arg2[%c0, %c0_0, %c0_1, %c0_2] : memref<2x4x2x128xf32, #tpu.memory_space<vmem>>, vector<2x4x2x128xf32>
    %cst = arith.constant dense<0.000000e+00> : vector<2x2x128xf32>
    %1 = vector.multi_reduction <add>, %0, %cst [1] : vector<2x4x2x128xf32> to vector<2x2x128xf32>
    %2 = vector.shape_cast %1 : vector<2x2x128xf32> to vector<2x1x2x128xf32>
    %cst_3 = arith.constant 4.000000e+00 : f32
    %3 = vector.broadcast %cst_3 : f32 to vector<2x1x2x128xf32>
    %4 = arith.divf %2, %3 : vector<2x1x2x128xf32>
    %5 = vector.broadcast %4 : vector<2x1x2x128xf32> to vector<2x4x2x128xf32>
    %6 = arith.subf %0, %5 : vector<2x4x2x128xf32>
    %7 = arith.mulf %6, %6 : vector<2x4x2x128xf32>
    %cst_4 = arith.constant dense<0.000000e+00> : vector<2x2x128xf32>
    %8 = vector.multi_reduction <add>, %7, %cst_4 [1] : vector<2x4x2x128xf32> to vector<2x2x128xf32>
    %9 = vector.shape_cast %8 : vector<2x2x128xf32> to vector<2x1x2x128xf32>
    %cst_5 = arith.constant 0.333333343 : f32
    %10 = vector.broadcast %cst_5 : f32 to vector<2x1x2x128xf32>
    %11 = arith.mulf %9, %10 : vector<2x1x2x128xf32>
    %cst_6 = arith.constant 9.99999974E-6 : f32
    %12 = vector.broadcast %cst_6 : f32 to vector<2x1x2x128xf32>
    %13 = arith.addf %11, %12 : vector<2x1x2x128xf32>
    %14 = math.rsqrt %13 : vector<2x1x2x128xf32>
    %c0_7 = arith.constant 0 : index
    %c0_8 = arith.constant 0 : index
    %c0_9 = arith.constant 0 : index
    %15 = vector.load %arg3[%c0_7, %c0_8, %c0_9] : memref<1x2x128xf32, #tpu.memory_space<vmem>>, vector<1x2x128xf32>
    %16 = vector.shape_cast %15 : vector<1x2x128xf32> to vector<1x1x2x128xf32>
    %17 = vector.broadcast %16 : vector<1x1x2x128xf32> to vector<2x1x2x128xf32>
    %18 = arith.mulf %14, %17 : vector<2x1x2x128xf32>
    %c0_10 = arith.constant 0 : index
    %c0_11 = arith.constant 0 : index
    %c0_12 = arith.constant 0 : index
    %19 = vector.load %arg4[%c0_10, %c0_11, %c0_12] : memref<1x2x128xf32, #tpu.memory_space<vmem>>, vector<1x2x128xf32>
    %20 = arith.mulf %4, %18 : vector<2x1x2x128xf32>
    %21 = vector.shape_cast %19 : vector<1x2x128xf32> to vector<1x1x2x128xf32>
    %22 = vector.broadcast %21 : vector<1x1x2x128xf32> to vector<2x1x2x128xf32>
    %23 = arith.subf %22, %20 : vector<2x1x2x128xf32>
    %c0_13 = arith.constant 0 : index
    %c0_14 = arith.constant 0 : index
    %c0_15 = arith.constant 0 : index
    %c0_16 = arith.constant 0 : index
    %24 = vector.load %arg2[%c0_13, %c0_14, %c0_15, %c0_16] : memref<2x4x2x128xf32, #tpu.memory_space<vmem>>, vector<2x4x2x128xf32>
    %25 = vector.broadcast %18 : vector<2x1x2x128xf32> to vector<2x4x2x128xf32>
    %26 = arith.mulf %24, %25 : vector<2x4x2x128xf32>
    %27 = vector.broadcast %23 : vector<2x1x2x128xf32> to vector<2x4x2x128xf32>
    %28 = arith.addf %26, %27 : vector<2x4x2x128xf32>
    %c0_17 = arith.constant 0 : index
    %c0_18 = arith.constant 0 : index
    %c0_19 = arith.constant 0 : index
    %c0_20 = arith.constant 0 : index
    %29 = vector.load %arg5[%c0_17, %c0_18, %c0_19, %c0_20] : memref<2x4x2x128xf32, #tpu.memory_space<vmem>>, vector<2x4x2x128xf32>
    tpu.vector_store %arg5[%c0_17, %c0_18, %c0_19, %c0_20], %28 {strides = array<i32>} : memref<2x4x2x128xf32, #tpu.memory_space<vmem>>, vector<2x4x2x128xf32>,
    return
  }
  func.func @transform_0(%arg0: i32, %arg1: i32) -> (i32, i32, i32, i32) {
    %c0_i32 = arith.constant 0 : i32
    %c0_i32_0 = arith.constant 0 : i32
    %c0_i32_1 = arith.constant 0 : i32
    return %arg1, %c0_i32, %arg0, %c0_i32_0 : i32, i32, i32, i32
  }
  func.func @transform_1(%arg0: i32, %arg1: i32) -> (i32, i32, i32) {
    %c0_i32 = arith.constant 0 : i32
    %c0_i32_0 = arith.constant 0 : i32
    %c0_i32_1 = arith.constant 0 : i32
    return %c0_i32, %arg0, %c0_i32_0 : i32, i32, i32
  }
  func.func @transform_2(%arg0: i32, %arg1: i32) -> (i32, i32, i32) {
    %c0_i32 = arith.constant 0 : i32
    %c0_i32_0 = arith.constant 0 : i32
    %c0_i32_1 = arith.constant 0 : i32
    return %c0_i32, %arg0, %c0_i32_0 : i32, i32, i32
  }
  func.func @transform_3(%arg0: i32, %arg1: i32) -> (i32, i32, i32, i32) {
    %c0_i32 = arith.constant 0 : i32
    %c0_i32_0 = arith.constant 0 : i32
    %c0_i32_1 = arith.constant 0 : i32
    return %arg1, %c0_i32, %arg0, %c0_i32_0 : i32, i32, i32, i32
  }
}

</mosaic_0001>

<llo_original>
// kernel: tpu_custom_call.1
$region0: #{tpu_custom_call.1}
  #allocation0 [shape = 'u32[]', space=smem, size = 0x4, offset = 0x4, fixed_abs, tag = 'smem constant byte address 0x4 - core index']
  #allocation1 [shape = 'u32[72,128]{1,0:T(1,128)}', space=vmem, size = 0x9000, scoped, tag = 'internal scratch']
  %s0 = inlined_call_operand.hbm [shape: f32[2,4,2,128], index: 0, kind: input, shape index: {}]
  %s1 = inlined_call_operand.hbm [shape: f32[1,2,128], index: 1, kind: input, shape index: {}]
  %s2 = inlined_call_operand.hbm [shape: f32[1,2,128], index: 2, kind: input, shape index: {}]
  %s3 = inlined_call_operand.hbm [shape: f32[2,4,2,128], index: 3, kind: output, shape index: {}]
  %s4 = sld [smem:[#allocation0]]
  $region34: #{tpu_custom_call.1} parent=0
    _
  %s6 = ssub.s32 1, %s4
  %s7 = scalar_select 0, %s6, %s4
  $region1: #{tpu_custom_call.1} parent=0
    #allocation2 [shape = 'u8[8192]{0}', space=vmem, size = 0x2000, scoped, tag = 'input window, operand 0, single buffered']
    #allocation3 [shape = 's32[1]{0}', space=sflag, size = 0x4, scoped, tag = 'scoped memory for tpu_custom_call.1']
    #allocation4 [shape = 's32[1]{0}', space=sflag, size = 0x4, scoped, tag = 'scoped memory for tpu_custom_call.1']
    #allocation5 [shape = 'u8[1024]{0}', space=vmem, size = 0x400, scoped, tag = 'input window, operand 1, single buffered']
    #allocation6 [shape = 's32[1]{0}', space=sflag, size = 0x4, scoped, tag = 'scoped memory for tpu_custom_call.1']
    #allocation7 [shape = 'u8[1024]{0}', space=vmem, size = 0x400, scoped, tag = 'input window, operand 2, single buffered']
    #allocation8 [shape = 'u8[8192]{0}', space=vmem, size = 0x2000, scoped, tag = 'output window, operand 0, single buffered']
    %8 = vsyncpa [#allocation3], 0
    %9 = vsyncpa [#allocation6], 0
    %10 = vsyncpa [#allocation4], 0
    // Predicated region
    $region2: #{tpu_custom_call.1} parent=1 // pred_check
      _
    $region3: #{tpu_custom_call.1} parent=1 // pred_check_branch
      %12 = sbr.rel (0) target = $region5
    $region4: #{tpu_custom_call.1} parent=1 // pred_region
      %14 = vsyncadd [#allocation3], 0
      %s15 = sshll.u32 %s0, 4
      %s16 = int_to_ptr.hbm [resolvable:$true] %s15
      %s17 = sshll.u32 [#allocation2], 4
      %s18 = int_to_ptr.vmem [resolvable:$true] %s17
      %23 = dma.hbm_to_vmem [thread:$0]  %s16, 256, %s18, [#allocation3], 32, 32, 2
    $region5: #{tpu_custom_call.1} parent=1 // pred_fallthru
      _
    // Predicated region
    $region6: #{tpu_custom_call.1} parent=1 // pred_check
      _
    $region7: #{tpu_custom_call.1} parent=1 // pred_check_branch
      %25 = sbr.rel (0) target = $region9
    $region8: #{tpu_custom_call.1} parent=1 // pred_region
      %27 = vsyncadd [#allocation6], 0
      %s29 = sshll.u32 %s1, 4
      %s30 = int_to_ptr.hbm [resolvable:$true] %s29
      %s31 = sshll.u32 [#allocation5], 4
      %s32 = int_to_ptr.vmem [resolvable:$true] %s31
      %34 = dma.hbm_to_vmem [thread:$0]  %s30, 32, %s32, [#allocation6]
    $region9: #{tpu_custom_call.1} parent=1 // pred_fallthru
      _
    // Predicated region
    $region10: #{tpu_custom_call.1} parent=1 // pred_check
      _
    $region11: #{tpu_custom_call.1} parent=1 // pred_check_branch
      %36 = sbr.rel (0) target = $region13
    $region12: #{tpu_custom_call.1} parent=1 // pred_region
      %38 = vsyncadd [#allocation6], 0
      %s40 = sshll.u32 %s2, 4
      %s41 = int_to_ptr.hbm [resolvable:$true] %s40
      %s42 = sshll.u32 [#allocation7], 4
      %s43 = int_to_ptr.vmem [resolvable:$true] %s42
      %45 = dma.hbm_to_vmem [thread:$0]  %s41, 32, %s43, [#allocation6]
    $region13: #{tpu_custom_call.1} parent=1 // pred_fallthru
      _
    // Predicated region
    $region14: #{tpu_custom_call.1} parent=1 // pred_check
      _
    $region15: #{tpu_custom_call.1} parent=1 // pred_check_branch
      %47 = sbr.rel (0) target = $region17
    $region16: #{tpu_custom_call.1} parent=1 // pred_region
      %49 = dma.done [#allocation3], 256
    $region17: #{tpu_custom_call.1} parent=1 // pred_fallthru
      _
    // Predicated region
    $region18: #{tpu_custom_call.1} parent=1 // pred_check
      _
    $region19: #{tpu_custom_call.1} parent=1 // pred_check_branch
      %51 = sbr.rel (0) target = $region21
    $region20: #{tpu_custom_call.1} parent=1 // pred_region
      %53 = dma.done [#allocation6], 32
    $region21: #{tpu_custom_call.1} parent=1 // pred_fallthru
      _
    // Predicated region
    $region22: #{tpu_custom_call.1} parent=1 // pred_check
      _
    $region23: #{tpu_custom_call.1} parent=1 // pred_check_branch
      %55 = sbr.rel (0) target = $region25
    $region24: #{tpu_custom_call.1} parent=1 // pred_region
      %57 = dma.done [#allocation6], 32
    $region25: #{tpu_custom_call.1} parent=1 // pred_fallthru
      _
    %v58 = vld [vmem:[#allocation2] sm:$0x3]
    %v59 = vld [vmem:[#allocation2 + $0x2] sm:$0x3]
    %v60 = vld [vmem:[#allocation2 + $0x4] sm:$0x3]
    %v61 = vld [vmem:[#allocation2 + $0x6] sm:$0x3]
    %v62 = vld [vmem:[#allocation2 + $0x8] sm:$0x3]
    %v63 = vld [vmem:[#allocation2 + $0xa] sm:$0x3]
    %v64 = vld [vmem:[#allocation2 + $0xc] sm:$0x3]
    %v65 = vld [vmem:[#allocation2 + $0xe] sm:$0x3]
    %vm66 = vcmask 1041408
    %v67 = vsel %vm66, %v58, 0.0
    %v68 = vsel %vm66, %v59, 0.0
    %v69 = vadd.f32 %v67, %v68
    %v70 = vsel %vm66, %v60, 0.0
    %v71 = vadd.f32 %v69, %v70
    %v72 = vsel %vm66, %v61, 0.0
    %v73 = vadd.f32 %v71, %v72
    %v74 = vsel %vm66, %v62, 0.0
    %v75 = vsel %vm66, %v63, 0.0
    %v76 = vadd.f32 %v74, %v75
    %v77 = vsel %vm66, %v64, 0.0
    %v78 = vadd.f32 %v76, %v77
    %v79 = vsel %vm66, %v65, 0.0
    %v80 = vadd.f32 %v78, %v79
    %v81 = vrcp.pop 4.0
    %v82 = vmul.f32 4.0, %v81
    %v83 = vsub.f32 1.0, %v82
    %v84 = vmul.f32 %v81, %v83
    %v85 = vadd.f32 %v81, %v84
    %vm86 = vweird.f32 %v81
    %v87 = vsel %vm86, %v81, %v85
    %v88 = vmul.f32 %v73, %v87
    %v89 = vmul.f32 %v80, %v87
    %v90 = vsub.f32 %v58, %v88
    %v91 = vsub.f32 %v59, %v88
    %v92 = vsub.f32 %v60, %v88
    %v93 = vsub.f32 %v61, %v88
    %v94 = vsub.f32 %v62, %v89
    %v95 = vsub.f32 %v63, %v89
    %v96 = vsub.f32 %v64, %v89
    %v97 = vsub.f32 %v65, %v89
    %v98 = vmul.f32 %v90, %v90
    %v99 = vmul.f32 %v91, %v91
    %v100 = vmul.f32 %v92, %v92
    %v101 = vmul.f32 %v93, %v93
    %v102 = vmul.f32 %v94, %v94
    %v103 = vmul.f32 %v95, %v95
    %v104 = vmul.f32 %v96, %v96
    %v105 = vmul.f32 %v97, %v97
    %v106 = vsel %vm66, %v98, 0.0
    %v107 = vsel %vm66, %v99, 0.0
    %v108 = vadd.f32 %v106, %v107
    %v109 = vsel %vm66, %v100, 0.0
    %v110 = vadd.f32 %v108, %v109
    %v111 = vsel %vm66, %v101, 0.0
    %v112 = vadd.f32 %v110, %v111
    %v113 = vsel %vm66, %v102, 0.0
    %v114 = vsel %vm66, %v103, 0.0
    %v115 = vadd.f32 %v113, %v114
    %v116 = vsel %vm66, %v104, 0.0
    %v117 = vadd.f32 %v115, %v116
    %v118 = vsel %vm66, %v105, 0.0
    %v119 = vadd.f32 %v117, %v118
    %v120 = vmul.f32 %v112, 0.33333334
    %v121 = vmul.f32 %v119, 0.33333334
    %v122 = vadd.f32 %v120, 1e-05
    %v123 = vadd.f32 %v121, 1e-05
    %v124 = vrsqrt.pop %v122
    %v125 = vmul.f32 %v124, %v122
    %v126 = vmul.f32 %v125, %v124
    %v127 = vmul.f32 0.5, %v126
    %v128 = vsub.f32 1.5, %v127
    %v129 = vmul.f32 %v124, %v128
    %vm130 = vweird.f32 %v122
    %vm131 = vweird.f32 %v124
    %vm132 = vmor %vm130, %vm131
    %v133 = vsel %vm132, %v124, %v129
    %v134 = vrsqrt.pop %v123
    %v135 = vmul.f32 %v134, %v123
    %v136 = vmul.f32 %v135, %v134
    %v137 = vmul.f32 0.5, %v136
    %v138 = vsub.f32 1.5, %v137
    %v139 = vmul.f32 %v134, %v138
    %vm140 = vweird.f32 %v123
    %vm141 = vweird.f32 %v134
    %vm142 = vmor %vm140, %vm141
    %v143 = vsel %vm142, %v134, %v139
    %v144 = vld [vmem:[#allocation5] sm:$0x3]
    %v145 = vmul.f32 %v133, %v144
    %v146 = vmul.f32 %v143, %v144
    %v147 = vld [vmem:[#allocation7] sm:$0x3]
    %v148 = vmul.f32 %v88, %v145
    %v149 = vmul.f32 %v89, %v146
    %v150 = vsub.f32 %v147, %v148
    %v151 = vsub.f32 %v147, %v149
    %v152 = vmul.f32 %v58, %v145
    %v153 = vmul.f32 %v59, %v145
    %v154 = vmul.f32 %v60, %v145
    %v155 = vmul.f32 %v61, %v145
    %v156 = vmul.f32 %v62, %v146
    %v157 = vmul.f32 %v63, %v146
    %v158 = vmul.f32 %v64, %v146
    %v159 = vmul.f32 %v65, %v146
    %v160 = vadd.f32 %v152, %v150
    %v161 = vadd.f32 %v153, %v150
    %v162 = vadd.f32 %v154, %v150
    %v163 = vadd.f32 %v155, %v150
    %v164 = vadd.f32 %v156, %v151
    %v165 = vadd.f32 %v157, %v151
    %v166 = vadd.f32 %v158, %v151
    %v167 = vadd.f32 %v159, %v151
    %168 = vst [vmem:[#allocation8] sm:$0x3] %v160
    %169 = vst [vmem:[#allocation8 + $0x2] sm:$0x3] %v161
    %170 = vst [vmem:[#allocation8 + $0x4] sm:$0x3] %v162
    %171 = vst [vmem:[#allocation8 + $0x6] sm:$0x3] %v163
    %172 = vst [vmem:[#allocation8 + $0x8] sm:$0x3] %v164
    %173 = vst [vmem:[#allocation8 + $0xa] sm:$0x3] %v165
    %174 = vst [vmem:[#allocation8 + $0xc] sm:$0x3] %v166
    %175 = vst [vmem:[#allocation8 + $0xe] sm:$0x3] %v167
    // Predicated region
    $region26: #{tpu_custom_call.1} parent=1 // pred_check
      _
    $region27: #{tpu_custom_call.1} parent=1 // pred_check_branch
      %177 = sbr.rel (0) target = $region29
    $region28: #{tpu_custom_call.1} parent=1 // pred_region
      %179 = vsyncadd [#allocation4], 0
      %s180 = sshll.u32 [#allocation8], 4
      %s181 = int_to_ptr.vmem [resolvable:$true] %s180
      %s182 = sshll.u32 %s3, 4
      %s183 = int_to_ptr.hbm [resolvable:$true] %s182
      %188 = dma.vmem_to_hbm [thread:$0]  %s181, 256, %s183, [#allocation4], 32, 32, 2
    $region29: #{tpu_custom_call.1} parent=1 // pred_fallthru
      _
    // Predicated region
    $region30: #{tpu_custom_call.1} parent=1 // pred_check
      _
    $region31: #{tpu_custom_call.1} parent=1 // pred_check_branch
      %190 = sbr.rel (0) target = $region33
    $region32: #{tpu_custom_call.1} parent=1 // pred_region
      %192 = dma.done [#allocation4], 256
    $region33: #{tpu_custom_call.1} parent=1 // pred_fallthru
      _
    %193 = vsyncpa [#allocation3], 1
    %194 = vsyncpa [#allocation6], 1
    %195 = vsyncpa [#allocation4], 1

</llo_original>
